<compile_context>
chip_gen: v5e
topology: v5e:2x2
jax: 0.10.0
libtpu: 0.0.40
codegen_flags: <defaults>
</compile_context>

<pallas_src>
import jax
import jax.numpy as jnp
from jax.experimental import pallas as pl
from jax.experimental.pallas import tpu as pltpu

# ----------------------------- model hyper-params ---------------------------
T = 8          # sequence length
B = 2          # batch
N_INP = 4      # input features per step
N_HID = 128    # hidden units per channel (== lane width -> lane-dense tiles)
N_CH = 2       # channels
N_OUT = 10     # readout classes
KSIZE = 3
PAD = KSIZE // 2
H = N_HID * N_CH   # flattened hidden size
LANE = 128         # lane-dense padding width for the readout


# ------------------------------- Pallas kernel ------------------------------
def cornn_kernel(pre_ref, wy_ref, wr_ref, br_ref, out_ref):
    """Single invocation: unrolled T-step recurrence + lane-dense readout.

    pre_ref : (T*N_CH, B, N_HID)          Wx(x_t)+bx+by, per (t, out_channel)
    wy_ref  : (N_CH*N_CH*KSIZE, B, N_HID) LC weights, pre-broadcast over batch
    wr_ref  : (N_CH, N_HID, LANE)         per-channel readout weights (zero padded)
    br_ref  : (1, LANE)                   readout bias (zero padded)
    out_ref : (B, LANE)
    """
    # Load LC weights once into locals (already broadcast over batch).
    wy = [[[wy_ref[(o * N_CH + c) * KSIZE + k] for k in range(KSIZE)]
           for c in range(N_CH)] for o in range(N_CH)]

    # Hidden state: one lane-dense (B, N_HID) tile per channel, lives in vregs.
    state = [jnp.zeros((B, N_HID), jnp.float32) for _ in range(N_CH)]

    # Unrolled time recurrence (T is small and static).
    for t in range(T):
        # Circular shifts of the previous state, computed once per (c, shift).
        rolled = []
        for c in range(N_CH):
            per_k = []
            for k in range(KSIZE):
                shift = PAD - k                       # static: {1, 0, -1}
                per_k.append(state[c] if shift == 0
                             else jnp.roll(state[c], shift, axis=1))
            rolled.append(per_k)

        new_state = []
        for o in range(N_CH):
            acc = pre_ref[t * N_CH + o]               # Wx(x_t)+bx+by  (B, N_HID)
            for c in range(N_CH):
                for k in range(KSIZE):
                    acc = acc + rolled[c][k] * wy[o][c][k]
            new_state.append(jnp.tanh(acc))
        state = new_state

    # Readout after the final step (lane-dense, per-channel contraction).
    out = jnp.dot(state[0], wr_ref[0], preferred_element_type=jnp.float32)
    for c in range(1, N_CH):
        out = out + jnp.dot(state[c], wr_ref[c], preferred_element_type=jnp.float32)
    out_ref[...] = out + br_ref[...]


@jax.jit
def cornn_forward(x, wx, bx, wy, by, wr, br):
    """x: (T,B,N_INP); wx: (H,N_INP); wy: (N_CH,N_CH,N_HID,KSIZE); wr: (N_OUT,H)."""
    # --- hoist the input projection (does not depend on hy) out of the kernel ---
    pre = jnp.dot(x.reshape(T * B, N_INP), wx.T,
                  preferred_element_type=jnp.float32) + bx          # (T*B, H)
    pre = pre.reshape(T, B, N_CH, N_HID).transpose(0, 2, 1, 3)      # (T, N_CH, B, N_HID)
    pre = pre + by[None, :, None, :]                                # fold LC bias
    pre = pre.reshape(T * N_CH, B, N_HID)

    # --- LC weights: (o,c,pos,k) -> row ((o*N_CH+c)*KSIZE+k), broadcast over batch ---
    wy_k = jnp.transpose(wy, (0, 1, 3, 2)).reshape(N_CH * N_CH * KSIZE, 1, N_HID)
    wy_b = jnp.broadcast_to(wy_k, (N_CH * N_CH * KSIZE, B, N_HID)).astype(jnp.float32)

    # --- readout: per-channel (N_HID, N_OUT) slabs, zero-padded lane-dense ---
    wr_c = wr.reshape(N_OUT, N_CH, N_HID).transpose(1, 2, 0)        # (N_CH, N_HID, N_OUT)
    wr_pad = jnp.zeros((N_CH, N_HID, LANE), jnp.float32).at[:, :, :N_OUT].set(wr_c)
    br_pad = jnp.zeros((1, LANE), jnp.float32).at[0, :N_OUT].set(br)

    flops = 2 * T * N_CH * N_CH * KSIZE * B * N_HID + 2 * N_CH * B * N_HID * LANE
    transc = T * N_CH * B * N_HID
    nbytes = 4 * (pre.size + wy_b.size + wr_pad.size + br_pad.size + B * LANE)

    out_padded = pl.pallas_call(
        cornn_kernel,
        out_shape=jax.ShapeDtypeStruct((B, LANE), jnp.float32),
        grid=(1,),
        in_specs=[
            pl.BlockSpec((T * N_CH, B, N_HID), lambda i: (0, 0, 0)),          # pre
            pl.BlockSpec((N_CH * N_CH * KSIZE, B, N_HID), lambda i: (0, 0, 0)),  # Wy
            pl.BlockSpec((N_CH, N_HID, LANE), lambda i: (0, 0, 0)),            # Wr^T (padded)
            pl.BlockSpec((1, LANE), lambda i: (0, 0)),                         # br (padded)
        ],
        out_specs=pl.BlockSpec((B, LANE), lambda i: (0, 0)),
        compiler_params=pltpu.CompilerParams(
            dimension_semantics=("arbitrary",)),
        cost_estimate=pl.CostEstimate(flops=flops, transcendentals=transc,
                                      bytes_accessed=nbytes),
    )(pre, wy_b, wr_pad, br_pad)

    # lane-dense store inside the kernel; slice the real classes outside
    return out_padded[:, :N_OUT]
    # NOTE: if B grows, make batch a leading "parallel" grid axis in multiples of 8.


# --------------------------- pure-JAX reference ------------------------------
def ref_forward(x, wx, bx, wy, by, wr, br):
    """Faithful re-implementation of the PyTorch forward (pad+unfold style)."""
    wy5 = wy[None]                                        # (1, N_CH, N_CH, N_HID, KSIZE)
    hy = jnp.zeros((B, H), jnp.float32)
    for t in range(T):
        h3 = hy.reshape(B, N_CH, N_HID)
        padded = jnp.concatenate([h3[..., -PAD:], h3, h3[..., :PAD]], axis=-1)
        unf = jnp.stack([padded[..., p:p + KSIZE] for p in range(N_HID)], axis=2)
        lc = (unf[:, None] * wy5).sum(axis=(2, -1)) + by[None]   # (B, N_CH, N_HID)
        hy = jnp.tanh(x[t] @ wx.T + bx + lc.reshape(B, H))
    return hy @ wr.T + br
    # TODO(synk): get_seq=True path (stacking per-step hidden states) not exposed.


# ---------------------------------- main -------------------------------------
if __name__ == "__main__":
    key = jax.random.PRNGKey(0)
    k_x, k_wx, k_bx, k_wr, k_br = jax.random.split(key, 5)

    # inputs
    x = jax.random.normal(k_x, (T, B, N_INP), dtype=jnp.float32)

    # Wx: Linear(n_inp, n_hid*n_ch), solo_init='no' -> normal(0, 0.001)
    wx = 0.001 * jax.random.normal(k_wx, (H, N_INP), dtype=jnp.float32)
    bx = jax.random.uniform(k_bx, (H,), dtype=jnp.float32,
                            minval=-1.0 / jnp.sqrt(N_INP), maxval=1.0 / jnp.sqrt(N_INP))

    # Wy: LocallyConnected1d, init='eye' -> dirac kernel repeated over positions, zero bias
    wy = jnp.zeros((N_CH, N_CH, N_HID, KSIZE), dtype=jnp.float32)
    for i in range(N_CH):
        wy = wy.at[i, i, :, KSIZE // 2].set(1.0)
    by = jnp.zeros((N_CH, N_HID), dtype=jnp.float32)

    # readout: Linear(n_hid*n_ch, n_out), default-ish uniform init
    wr = jax.random.uniform(k_wr, (N_OUT, H), dtype=jnp.float32,
                            minval=-1.0 / jnp.sqrt(H), maxval=1.0 / jnp.sqrt(H))
    br = jax.random.uniform(k_br, (N_OUT,), dtype=jnp.float32,
                            minval=-1.0 / jnp.sqrt(H), maxval=1.0 / jnp.sqrt(H))

    out = cornn_forward(x, wx, bx, wy, by, wr, br)
    jax.block_until_ready(out)

    out_ref = ref_forward(x, wx, bx, wy, by, wr, br)
    assert out.shape == (B, N_OUT)
    assert jnp.allclose(out, out_ref, atol=1e-5, rtol=1e-5), (
        f"max err {jnp.max(jnp.abs(out - out_ref))}")

    print("KERNEL_OK")
</pallas_src>

<mosaic_0001>
module attributes {stable_mosaic.version = 11 : i64} {
  func.func @cornn_kernel(%arg0: i32, %arg1: memref<16x2x128xf32, #tpu.memory_space<vmem>>, %arg2: memref<12x2x128xf32, #tpu.memory_space<vmem>>, %arg3: memref<2x128x128xf32, #tpu.memory_space<vmem>>, %arg4: memref<1x128xf32, #tpu.memory_space<vmem>>, %arg5: memref<2x128xf32, #tpu.memory_space<vmem>>) attributes {dimension_semantics = [#tpu.dimension_semantics<arbitrary>], iteration_bounds = array<i64: 1>, scalar_prefetch = 0 : i64, scratch_operands = 0 : i64, tpu.core_type = #tpu.core_type<tc>, window_params = [{pipeline_mode = #tpu.pipeline_mode<synchronous>, transform_indices = @transform_0, window_bounds = array<i64: 16, 2, 128>}, {pipeline_mode = #tpu.pipeline_mode<synchronous>, transform_indices = @transform_1, window_bounds = array<i64: 12, 2, 128>}, {pipeline_mode = #tpu.pipeline_mode<synchronous>, transform_indices = @transform_2, window_bounds = array<i64: 2, 128, 128>}, {pipeline_mode = #tpu.pipeline_mode<synchronous>, transform_indices = @transform_3, window_bounds = array<i64: 1, 128>}, {pipeline_mode = #tpu.pipeline_mode<synchronous>, transform_indices = @transform_4, window_bounds = array<i64: 2, 128>}]} {
    %c0 = arith.constant 0 : index
    %c0_0 = arith.constant 0 : index
    %c0_1 = arith.constant 0 : index
    %0 = vector.load %arg2[%c0, %c0_0, %c0_1] : memref<12x2x128xf32, #tpu.memory_space<vmem>>, vector<1x2x128xf32>
    %1 = vector.shape_cast %0 : vector<1x2x128xf32> to vector<2x128xf32>
    %c1 = arith.constant 1 : index
    %c0_2 = arith.constant 0 : index
    %c0_3 = arith.constant 0 : index
    %2 = vector.load %arg2[%c1, %c0_2, %c0_3] : memref<12x2x128xf32, #tpu.memory_space<vmem>>, vector<1x2x128xf32>
    %3 = vector.shape_cast %2 : vector<1x2x128xf32> to vector<2x128xf32>
    %c2 = arith.constant 2 : index
    %c0_4 = arith.constant 0 : index
    %c0_5 = arith.constant 0 : index
    %4 = vector.load %arg2[%c2, %c0_4, %c0_5] : memref<12x2x128xf32, #tpu.memory_space<vmem>>, vector<1x2x128xf32>
    %5 = vector.shape_cast %4 : vector<1x2x128xf32> to vector<2x128xf32>
    %c3 = arith.constant 3 : index
    %c0_6 = arith.constant 0 : index
    %c0_7 = arith.constant 0 : index
    %6 = vector.load %arg2[%c3, %c0_6, %c0_7] : memref<12x2x128xf32, #tpu.memory_space<vmem>>, vector<1x2x128xf32>
    %7 = vector.shape_cast %6 : vector<1x2x128xf32> to vector<2x128xf32>
    %c4 = arith.constant 4 : index
    %c0_8 = arith.constant 0 : index
    %c0_9 = arith.constant 0 : index
    %8 = vector.load %arg2[%c4, %c0_8, %c0_9] : memref<12x2x128xf32, #tpu.memory_space<vmem>>, vector<1x2x128xf32>
    %9 = vector.shape_cast %8 : vector<1x2x128xf32> to vector<2x128xf32>
    %c5 = arith.constant 5 : index
    %c0_10 = arith.constant 0 : index
    %c0_11 = arith.constant 0 : index
    %10 = vector.load %arg2[%c5, %c0_10, %c0_11] : memref<12x2x128xf32, #tpu.memory_space<vmem>>, vector<1x2x128xf32>
    %11 = vector.shape_cast %10 : vector<1x2x128xf32> to vector<2x128xf32>
    %c6 = arith.constant 6 : index
    %c0_12 = arith.constant 0 : index
    %c0_13 = arith.constant 0 : index
    %12 = vector.load %arg2[%c6, %c0_12, %c0_13] : memref<12x2x128xf32, #tpu.memory_space<vmem>>, vector<1x2x128xf32>
    %13 = vector.shape_cast %12 : vector<1x2x128xf32> to vector<2x128xf32>
    %c7 = arith.constant 7 : index
    %c0_14 = arith.constant 0 : index
    %c0_15 = arith.constant 0 : index
    %14 = vector.load %arg2[%c7, %c0_14, %c0_15] : memref<12x2x128xf32, #tpu.memory_space<vmem>>, vector<1x2x128xf32>
    %15 = vector.shape_cast %14 : vector<1x2x128xf32> to vector<2x128xf32>
    %c8 = arith.constant 8 : index
    %c0_16 = arith.constant 0 : index
    %c0_17 = arith.constant 0 : index
    %16 = vector.load %arg2[%c8, %c0_16, %c0_17] : memref<12x2x128xf32, #tpu.memory_space<vmem>>, vector<1x2x128xf32>
    %17 = vector.shape_cast %16 : vector<1x2x128xf32> to vector<2x128xf32>
    %c9 = arith.constant 9 : index
    %c0_18 = arith.constant 0 : index
    %c0_19 = arith.constant 0 : index
    %18 = vector.load %arg2[%c9, %c0_18, %c0_19] : memref<12x2x128xf32, #tpu.memory_space<vmem>>, vector<1x2x128xf32>
    %19 = vector.shape_cast %18 : vector<1x2x128xf32> to vector<2x128xf32>
    %c10 = arith.constant 10 : index
    %c0_20 = arith.constant 0 : index
    %c0_21 = arith.constant 0 : index
    %20 = vector.load %arg2[%c10, %c0_20, %c0_21] : memref<12x2x128xf32, #tpu.memory_space<vmem>>, vector<1x2x128xf32>
    %21 = vector.shape_cast %20 : vector<1x2x128xf32> to vector<2x128xf32>
    %c11 = arith.constant 11 : index
    %c0_22 = arith.constant 0 : index
    %c0_23 = arith.constant 0 : index
    %22 = vector.load %arg2[%c11, %c0_22, %c0_23] : memref<12x2x128xf32, #tpu.memory_space<vmem>>, vector<1x2x128xf32>
    %23 = vector.shape_cast %22 : vector<1x2x128xf32> to vector<2x128xf32>
    %cst = arith.constant 0.000000e+00 : f32
    %24 = vector.broadcast %cst : f32 to vector<2x128xf32>
    %cst_24 = arith.constant 0.000000e+00 : f32
    %25 = vector.broadcast %cst_24 : f32 to vector<2x128xf32>
    %26 = vector.extract_strided_slice %24 {offsets = [0, 127], sizes = [2, 1], strides = [1, 1]} : vector<2x128xf32> to vector<2x1xf32>
    %27 = vector.extract_strided_slice %24 {offsets = [0, 0], sizes = [2, 127], strides = [1, 1]} : vector<2x128xf32> to vector<2x127xf32>
    %28 = tpu.concatenate %26, %27 in 1 : vector<2x1xf32>, vector<2x127xf32> -> vector<2x128xf32>
    %29 = vector.extract_strided_slice %24 {offsets = [0, 1], sizes = [2, 127], strides = [1, 1]} : vector<2x128xf32> to vector<2x127xf32>
    %30 = vector.extract_strided_slice %24 {offsets = [0, 0], sizes = [2, 1], strides = [1, 1]} : vector<2x128xf32> to vector<2x1xf32>
    %31 = tpu.concatenate %29, %30 in 1 : vector<2x127xf32>, vector<2x1xf32> -> vector<2x128xf32>
    %32 = vector.extract_strided_slice %25 {offsets = [0, 127], sizes = [2, 1], strides = [1, 1]} : vector<2x128xf32> to vector<2x1xf32>
    %33 = vector.extract_strided_slice %25 {offsets = [0, 0], sizes = [2, 127], strides = [1, 1]} : vector<2x128xf32> to vector<2x127xf32>
    %34 = tpu.concatenate %32, %33 in 1 : vector<2x1xf32>, vector<2x127xf32> -> vector<2x128xf32>
    %35 = vector.extract_strided_slice %25 {offsets = [0, 1], sizes = [2, 127], strides = [1, 1]} : vector<2x128xf32> to vector<2x127xf32>
    %36 = vector.extract_strided_slice %25 {offsets = [0, 0], sizes = [2, 1], strides = [1, 1]} : vector<2x128xf32> to vector<2x1xf32>
    %37 = tpu.concatenate %35, %36 in 1 : vector<2x127xf32>, vector<2x1xf32> -> vector<2x128xf32>
    %c0_25 = arith.constant 0 : index
    %c0_26 = arith.constant 0 : index
    %c0_27 = arith.constant 0 : index
    %38 = vector.load %arg1[%c0_25, %c0_26, %c0_27] : memref<16x2x128xf32, #tpu.memory_space<vmem>>, vector<1x2x128xf32>
    %39 = vector.shape_cast %38 : vector<1x2x128xf32> to vector<2x128xf32>
    %40 = arith.mulf %28, %1 : vector<2x128xf32>
    %41 = arith.addf %39, %40 : vector<2x128xf32>
    %42 = arith.mulf %24, %3 : vector<2x128xf32>
    %43 = arith.addf %41, %42 : vector<2x128xf32>
    %44 = arith.mulf %31, %5 : vector<2x128xf32>
    %45 = arith.addf %43, %44 : vector<2x128xf32>
    %46 = arith.mulf %34, %7 : vector<2x128xf32>
    %47 = arith.addf %45, %46 : vector<2x128xf32>
    %48 = arith.mulf %25, %9 : vector<2x128xf32>
    %49 = arith.addf %47, %48 : vector<2x128xf32>
    %50 = arith.mulf %37, %11 : vector<2x128xf32>
    %51 = arith.addf %49, %50 : vector<2x128xf32>
    %52 = math.tanh %51 : vector<2x128xf32>
    %c1_28 = arith.constant 1 : index
    %c0_29 = arith.constant 0 : index
    %c0_30 = arith.constant 0 : index
    %53 = vector.load %arg1[%c1_28, %c0_29, %c0_30] : memref<16x2x128xf32, #tpu.memory_space<vmem>>, vector<1x2x128xf32>
    %54 = vector.shape_cast %53 : vector<1x2x128xf32> to vector<2x128xf32>
    %55 = arith.mulf %28, %13 : vector<2x128xf32>
    %56 = arith.addf %54, %55 : vector<2x128xf32>
    %57 = arith.mulf %24, %15 : vector<2x128xf32>
    %58 = arith.addf %56, %57 : vector<2x128xf32>
    %59 = arith.mulf %31, %17 : vector<2x128xf32>
    %60 = arith.addf %58, %59 : vector<2x128xf32>
    %61 = arith.mulf %34, %19 : vector<2x128xf32>
    %62 = arith.addf %60, %61 : vector<2x128xf32>
    %63 = arith.mulf %25, %21 : vector<2x128xf32>
    %64 = arith.addf %62, %63 : vector<2x128xf32>
    %65 = arith.mulf %37, %23 : vector<2x128xf32>
    %66 = arith.addf %64, %65 : vector<2x128xf32>
    %67 = math.tanh %66 : vector<2x128xf32>
    %68 = vector.extract_strided_slice %52 {offsets = [0, 127], sizes = [2, 1], strides = [1, 1]} : vector<2x128xf32> to vector<2x1xf32>
    %69 = vector.extract_strided_slice %52 {offsets = [0, 0], sizes = [2, 127], strides = [1, 1]} : vector<2x128xf32> to vector<2x127xf32>
    %70 = tpu.concatenate %68, %69 in 1 : vector<2x1xf32>, vector<2x127xf32> -> vector<2x128xf32>
    %71 = vector.extract_strided_slice %52 {offsets = [0, 1], sizes = [2, 127], strides = [1, 1]} : vector<2x128xf32> to vector<2x127xf32>
    %72 = vector.extract_strided_slice %52 {offsets = [0, 0], sizes = [2, 1], strides = [1, 1]} : vector<2x128xf32> to vector<2x1xf32>
    %73 = tpu.concatenate %71, %72 in 1 : vector<2x127xf32>, vector<2x1xf32> -> vector<2x128xf32>
    %74 = vector.extract_strided_slice %67 {offsets = [0, 127], sizes = [2, 1], strides = [1, 1]} : vector<2x128xf32> to vector<2x1xf32>
    %75 = vector.extract_strided_slice %67 {offsets = [0, 0], sizes = [2, 127], strides = [1, 1]} : vector<2x128xf32> to vector<2x127xf32>
    %76 = tpu.concatenate %74, %75 in 1 : vector<2x1xf32>, vector<2x127xf32> -> vector<2x128xf32>
    %77 = vector.extract_strided_slice %67 {offsets = [0, 1], sizes = [2, 127], strides = [1, 1]} : vector<2x128xf32> to vector<2x127xf32>
    %78 = vector.extract_strided_slice %67 {offsets = [0, 0], sizes = [2, 1], strides = [1, 1]} : vector<2x128xf32> to vector<2x1xf32>
    %79 = tpu.concatenate %77, %78 in 1 : vector<2x127xf32>, vector<2x1xf32> -> vector<2x128xf32>
    %c2_31 = arith.constant 2 : index
    %c0_32 = arith.constant 0 : index
    %c0_33 = arith.constant 0 : index
    %80 = vector.load %arg1[%c2_31, %c0_32, %c0_33] : memref<16x2x128xf32, #tpu.memory_space<vmem>>, vector<1x2x128xf32>
    %81 = vector.shape_cast %80 : vector<1x2x128xf32> to vector<2x128xf32>
    %82 = arith.mulf %70, %1 : vector<2x128xf32>
    %83 = arith.addf %81, %82 : vector<2x128xf32>
    %84 = arith.mulf %52, %3 : vector<2x128xf32>
    %85 = arith.addf %83, %84 : vector<2x128xf32>
    %86 = arith.mulf %73, %5 : vector<2x128xf32>
    %87 = arith.addf %85, %86 : vector<2x128xf32>
    %88 = arith.mulf %76, %7 : vector<2x128xf32>
    %89 = arith.addf %87, %88 : vector<2x128xf32>
    %90 = arith.mulf %67, %9 : vector<2x128xf32>
    %91 = arith.addf %89, %90 : vector<2x128xf32>
    %92 = arith.mulf %79, %11 : vector<2x128xf32>
    %93 = arith.addf %91, %92 : vector<2x128xf32>
    %94 = math.tanh %93 : vector<2x128xf32>
    %c3_34 = arith.constant 3 : index
    %c0_35 = arith.constant 0 : index
    %c0_36 = arith.constant 0 : index
    %95 = vector.load %arg1[%c3_34, %c0_35, %c0_36] : memref<16x2x128xf32, #tpu.memory_space<vmem>>, vector<1x2x128xf32>
    %96 = vector.shape_cast %95 : vector<1x2x128xf32> to vector<2x128xf32>
    %97 = arith.mulf %70, %13 : vector<2x128xf32>
    %98 = arith.addf %96, %97 : vector<2x128xf32>
    %99 = arith.mulf %52, %15 : vector<2x128xf32>
    %100 = arith.addf %98, %99 : vector<2x128xf32>
    %101 = arith.mulf %73, %17 : vector<2x128xf32>
    %102 = arith.addf %100, %101 : vector<2x128xf32>
    %103 = arith.mulf %76, %19 : vector<2x128xf32>
    %104 = arith.addf %102, %103 : vector<2x128xf32>
    %105 = arith.mulf %67, %21 : vector<2x128xf32>
    %106 = arith.addf %104, %105 : vector<2x128xf32>
    %107 = arith.mulf %79, %23 : vector<2x128xf32>
    %108 = arith.addf %106, %107 : vector<2x128xf32>
    %109 = math.tanh %108 : vector<2x128xf32>
    %110 = vector.extract_strided_slice %94 {offsets = [0, 127], sizes = [2, 1], strides = [1, 1]} : vector<2x128xf32> to vector<2x1xf32>
    %111 = vector.extract_strided_slice %94 {offsets = [0, 0], sizes = [2, 127], strides = [1, 1]} : vector<2x128xf32> to vector<2x127xf32>
    %112 = tpu.concatenate %110, %111 in 1 : vector<2x1xf32>, vector<2x127xf32> -> vector<2x128xf32>
    %113 = vector.extract_strided_slice %94 {offsets = [0, 1], sizes = [2, 127], strides = [1, 1]} : vector<2x128xf32> to vector<2x127xf32>
    %114 = vector.extract_strided_slice %94 {offsets = [0, 0], sizes = [2, 1], strides = [1, 1]} : vector<2x128xf32> to vector<2x1xf32>
    %115 = tpu.concatenate %113, %114 in 1 : vector<2x127xf32>, vector<2x1xf32> -> vector<2x128xf32>
    %116 = vector.extract_strided_slice %109 {offsets = [0, 127], sizes = [2, 1], strides = [1, 1]} : vector<2x128xf32> to vector<2x1xf32>
    %117 = vector.extract_strided_slice %109 {offsets = [0, 0], sizes = [2, 127], strides = [1, 1]} : vector<2x128xf32> to vector<2x127xf32>
    %118 = tpu.concatenate %116, %117 in 1 : vector<2x1xf32>, vector<2x127xf32> -> vector<2x128xf32>
    %119 = vector.extract_strided_slice %109 {offsets = [0, 1], sizes = [2, 127], strides = [1, 1]} : vector<2x128xf32> to vector<2x127xf32>
    %120 = vector.extract_strided_slice %109 {offsets = [0, 0], sizes = [2, 1], strides = [1, 1]} : vector<2x128xf32> to vector<2x1xf32>
    %121 = tpu.concatenate %119, %120 in 1 : vector<2x127xf32>, vector<2x1xf32> -> vector<2x128xf32>
    %c4_37 = arith.constant 4 : index
    %c0_38 = arith.constant 0 : index
    %c0_39 = arith.constant 0 : index
    %122 = vector.load %arg1[%c4_37, %c0_38, %c0_39] : memref<16x2x128xf32, #tpu.memory_space<vmem>>, vector<1x2x128xf32>
    %123 = vector.shape_cast %122 : vector<1x2x128xf32> to vector<2x128xf32>
    %124 = arith.mulf %112, %1 : vector<2x128xf32>
    %125 = arith.addf %123, %124 : vector<2x128xf32>
    %126 = arith.mulf %94, %3 : vector<2x128xf32>
    %127 = arith.addf %125, %126 : vector<2x128xf32>
    %128 = arith.mulf %115, %5 : vector<2x128xf32>
    %129 = arith.addf %127, %128 : vector<2x128xf32>
    %130 = arith.mulf %118, %7 : vector<2x128xf32>
    %131 = arith.addf %129, %130 : vector<2x128xf32>
    %132 = arith.mulf %109, %9 : vector<2x128xf32>
    %133 = arith.addf %131, %132 : vector<2x128xf32>
    %134 = arith.mulf %121, %11 : vector<2x128xf32>
    %135 = arith.addf %133, %134 : vector<2x128xf32>
    %136 = math.tanh %135 : vector<2x128xf32>
    %c5_40 = arith.constant 5 : index
    %c0_41 = arith.constant 0 : index
    %c0_42 = arith.constant 0 : index
    %137 = vector.load %arg1[%c5_40, %c0_41, %c0_42] : memref<16x2x128xf32, #tpu.memory_space<vmem>>, vector<1x2x128xf32>
    %138 = vector.shape_cast %137 : vector<1x2x128xf32> to vector<2x128xf32>
    %139 = arith.mulf %112, %13 : vector<2x128xf32>
    %140 = arith.addf %138, %139 : vector<2x128xf32>
    %141 = arith.mulf %94, %15 : vector<2x128xf32>
    %142 = arith.addf %140, %141 : vector<2x128xf32>
    %143 = arith.mulf %115, %17 : vector<2x128xf32>
    %144 = arith.addf %142, %143 : vector<2x128xf32>
    %145 = arith.mulf %118, %19 : vector<2x128xf32>
    %146 = arith.addf %144, %145 : vector<2x128xf32>
    %147 = arith.mulf %109, %21 : vector<2x128xf32>
    %148 = arith.addf %146, %147 : vector<2x128xf32>
    %149 = arith.mulf %121, %23 : vector<2x128xf32>
    %150 = arith.addf %148, %149 : vector<2x128xf32>
    %151 = math.tanh %150 : vector<2x128xf32>
    %152 = vector.extract_strided_slice %136 {offsets = [0, 127], sizes = [2, 1], strides = [1, 1]} : vector<2x128xf32> to vector<2x1xf32>
    %153 = vector.extract_strided_slice %136 {offsets = [0, 0], sizes = [2, 127], strides = [1, 1]} : vector<2x128xf32> to vector<2x127xf32>
    %154 = tpu.concatenate %152, %153 in 1 : vector<2x1xf32>, vector<2x127xf32> -> vector<2x128xf32>
    %155 = vector.extract_strided_slice %136 {offsets = [0, 1], sizes = [2, 127], strides = [1, 1]} : vector<2x128xf32> to vector<2x127xf32>
    %156 = vector.extract_strided_slice %136 {offsets = [0, 0], sizes = [2, 1], strides = [1, 1]} : vector<2x128xf32> to vector<2x1xf32>
    %157 = tpu.concatenate %155, %156 in 1 : vector<2x127xf32>, vector<2x1xf32> -> vector<2x128xf32>
    %158 = vector.extract_strided_slice %151 {offsets = [0, 127], sizes = [2, 1], strides = [1, 1]} : vector<2x128xf32> to vector<2x1xf32>
    %159 = vector.extract_strided_slice %151 {offsets = [0, 0], sizes = [2, 127], strides = [1, 1]} : vector<2x128xf32> to vector<2x127xf32>
    %160 = tpu.concatenate %158, %159 in 1 : vector<2x1xf32>, vector<2x127xf32> -> vector<2x128xf32>
    %161 = vector.extract_strided_slice %151 {offsets = [0, 1], sizes = [2, 127], strides = [1, 1]} : vector<2x128xf32> to vector<2x127xf32>
    %162 = vector.extract_strided_slice %151 {offsets = [0, 0], sizes = [2, 1], strides = [1, 1]} : vector<2x128xf32> to vector<2x1xf32>
    %163 = tpu.concatenate %161, %162 in 1 : vector<2x127xf32>, vector<2x1xf32> -> vector<2x128xf32>
    %c6_43 = arith.constant 6 : index
    %c0_44 = arith.constant 0 : index
    %c0_45 = arith.constant 0 : index
    %164 = vector.load %arg1[%c6_43, %c0_44, %c0_45] : memref<16x2x128xf32, #tpu.memory_space<vmem>>, vector<1x2x128xf32>
    %165 = vector.shape_cast %164 : vector<1x2x128xf32> to vector<2x128xf32>
    %166 = arith.mulf %154, %1 : vector<2x128xf32>
    %167 = arith.addf %165, %166 : vector<2x128xf32>
    %168 = arith.mulf %136, %3 : vector<2x128xf32>
    %169 = arith.addf %167, %168 : vector<2x128xf32>
    %170 = arith.mulf %157, %5 : vector<2x128xf32>
    %171 = arith.addf %169, %170 : vector<2x128xf32>
    %172 = arith.mulf %160, %7 : vector<2x128xf32>
    %173 = arith.addf %171, %172 : vector<2x128xf32>
    %174 = arith.mulf %151, %9 : vector<2x128xf32>
    %175 = arith.addf %173, %174 : vector<2x128xf32>
    %176 = arith.mulf %163, %11 : vector<2x128xf32>
    %177 = arith.addf %175, %176 : vector<2x128xf32>
    %178 = math.tanh %177 : vector<2x128xf32>
    %c7_46 = arith.constant 7 : index
    %c0_47 = arith.constant 0 : index
    %c0_48 = arith.constant 0 : index
    %179 = vector.load %arg1[%c7_46, %c0_47, %c0_48] : memref<16x2x128xf32, #tpu.memory_space<vmem>>, vector<1x2x128xf32>
    %180 = vector.shape_cast %179 : vector<1x2x128xf32> to vector<2x128xf32>
    %181 = arith.mulf %154, %13 : vector<2x128xf32>
    %182 = arith.addf %180, %181 : vector<2x128xf32>
    %183 = arith.mulf %136, %15 : vector<2x128xf32>
    %184 = arith.addf %182, %183 : vector<2x128xf32>
    %185 = arith.mulf %157, %17 : vector<2x128xf32>
    %186 = arith.addf %184, %185 : vector<2x128xf32>
    %187 = arith.mulf %160, %19 : vector<2x128xf32>
    %188 = arith.addf %186, %187 : vector<2x128xf32>
    %189 = arith.mulf %151, %21 : vector<2x128xf32>
    %190 = arith.addf %188, %189 : vector<2x128xf32>
    %191 = arith.mulf %163, %23 : vector<2x128xf32>
    %192 = arith.addf %190, %191 : vector<2x128xf32>
    %193 = math.tanh %192 : vector<2x128xf32>
    %194 = vector.extract_strided_slice %178 {offsets = [0, 127], sizes = [2, 1], strides = [1, 1]} : vector<2x128xf32> to vector<2x1xf32>
    %195 = vector.extract_strided_slice %178 {offsets = [0, 0], sizes = [2, 127], strides = [1, 1]} : vector<2x128xf32> to vector<2x127xf32>
    %196 = tpu.concatenate %194, %195 in 1 : vector<2x1xf32>, vector<2x127xf32> -> vector<2x128xf32>
    %197 = vector.extract_strided_slice %178 {offsets = [0, 1], sizes = [2, 127], strides = [1, 1]} : vector<2x128xf32> to vector<2x127xf32>
    %198 = vector.extract_strided_slice %178 {offsets = [0, 0], sizes = [2, 1], strides = [1, 1]} : vector<2x128xf32> to vector<2x1xf32>
    %199 = tpu.concatenate %197, %198 in 1 : vector<2x127xf32>, vector<2x1xf32> -> vector<2x128xf32>
    %200 = vector.extract_strided_slice %193 {offsets = [0, 127], sizes = [2, 1], strides = [1, 1]} : vector<2x128xf32> to vector<2x1xf32>
    %201 = vector.extract_strided_slice %193 {offsets = [0, 0], sizes = [2, 127], strides = [1, 1]} : vector<2x128xf32> to vector<2x127xf32>
    %202 = tpu.concatenate %200, %201 in 1 : vector<2x1xf32>, vector<2x127xf32> -> vector<2x128xf32>
    %203 = vector.extract_strided_slice %193 {offsets = [0, 1], sizes = [2, 127], strides = [1, 1]} : vector<2x128xf32> to vector<2x127xf32>
    %204 = vector.extract_strided_slice %193 {offsets = [0, 0], sizes = [2, 1], strides = [1, 1]} : vector<2x128xf32> to vector<2x1xf32>
    %205 = tpu.concatenate %203, %204 in 1 : vector<2x127xf32>, vector<2x1xf32> -> vector<2x128xf32>
    %c8_49 = arith.constant 8 : index
    %c0_50 = arith.constant 0 : index
    %c0_51 = arith.constant 0 : index
    %206 = vector.load %arg1[%c8_49, %c0_50, %c0_51] : memref<16x2x128xf32, #tpu.memory_space<vmem>>, vector<1x2x128xf32>
    %207 = vector.shape_cast %206 : vector<1x2x128xf32> to vector<2x128xf32>
    %208 = arith.mulf %196, %1 : vector<2x128xf32>
    %209 = arith.addf %207, %208 : vector<2x128xf32>
    %210 = arith.mulf %178, %3 : vector<2x128xf32>
    %211 = arith.addf %209, %210 : vector<2x128xf32>
    %212 = arith.mulf %199, %5 : vector<2x128xf32>
    %213 = arith.addf %211, %212 : vector<2x128xf32>
    %214 = arith.mulf %202, %7 : vector<2x128xf32>
    %215 = arith.addf %213, %214 : vector<2x128xf32>
    %216 = arith.mulf %193, %9 : vector<2x128xf32>
    %217 = arith.addf %215, %216 : vector<2x128xf32>
    %218 = arith.mulf %205, %11 : vector<2x128xf32>
    %219 = arith.addf %217, %218 : vector<2x128xf32>
    %220 = math.tanh %219 : vector<2x128xf32>
    %c9_52 = arith.constant 9 : index
    %c0_53 = arith.constant 0 : index
    %c0_54 = arith.constant 0 : index
    %221 = vector.load %arg1[%c9_52, %c0_53, %c0_54] : memref<16x2x128xf32, #tpu.memory_space<vmem>>, vector<1x2x128xf32>
    %222 = vector.shape_cast %221 : vector<1x2x128xf32> to vector<2x128xf32>
    %223 = arith.mulf %196, %13 : vector<2x128xf32>
    %224 = arith.addf %222, %223 : vector<2x128xf32>
    %225 = arith.mulf %178, %15 : vector<2x128xf32>
    %226 = arith.addf %224, %225 : vector<2x128xf32>
    %227 = arith.mulf %199, %17 : vector<2x128xf32>
    %228 = arith.addf %226, %227 : vector<2x128xf32>
    %229 = arith.mulf %202, %19 : vector<2x128xf32>
    %230 = arith.addf %228, %229 : vector<2x128xf32>
    %231 = arith.mulf %193, %21 : vector<2x128xf32>
    %232 = arith.addf %230, %231 : vector<2x128xf32>
    %233 = arith.mulf %205, %23 : vector<2x128xf32>
    %234 = arith.addf %232, %233 : vector<2x128xf32>
    %235 = math.tanh %234 : vector<2x128xf32>
    %236 = vector.extract_strided_slice %220 {offsets = [0, 127], sizes = [2, 1], strides = [1, 1]} : vector<2x128xf32> to vector<2x1xf32>
    %237 = vector.extract_strided_slice %220 {offsets = [0, 0], sizes = [2, 127], strides = [1, 1]} : vector<2x128xf32> to vector<2x127xf32>
    %238 = tpu.concatenate %236, %237 in 1 : vector<2x1xf32>, vector<2x127xf32> -> vector<2x128xf32>
    %239 = vector.extract_strided_slice %220 {offsets = [0, 1], sizes = [2, 127], strides = [1, 1]} : vector<2x128xf32> to vector<2x127xf32>
    %240 = vector.extract_strided_slice %220 {offsets = [0, 0], sizes = [2, 1], strides = [1, 1]} : vector<2x128xf32> to vector<2x1xf32>
    %241 = tpu.concatenate %239, %240 in 1 : vector<2x127xf32>, vector<2x1xf32> -> vector<2x128xf32>
    %242 = vector.extract_strided_slice %235 {offsets = [0, 127], sizes = [2, 1], strides = [1, 1]} : vector<2x128xf32> to vector<2x1xf32>
    %243 = vector.extract_strided_slice %235 {offsets = [0, 0], sizes = [2, 127], strides = [1, 1]} : vector<2x128xf32> to vector<2x127xf32>
    %244 = tpu.concatenate %242, %243 in 1 : vector<2x1xf32>, vector<2x127xf32> -> vector<2x128xf32>
    %245 = vector.extract_strided_slice %235 {offsets = [0, 1], sizes = [2, 127], strides = [1, 1]} : vector<2x128xf32> to vector<2x127xf32>
    %246 = vector.extract_strided_slice %235 {offsets = [0, 0], sizes = [2, 1], strides = [1, 1]} : vector<2x128xf32> to vector<2x1xf32>
    %247 = tpu.concatenate %245, %246 in 1 : vector<2x127xf32>, vector<2x1xf32> -> vector<2x128xf32>
    %c10_55 = arith.constant 10 : index
    %c0_56 = arith.constant 0 : index
    %c0_57 = arith.constant 0 : index
    %248 = vector.load %arg1[%c10_55, %c0_56, %c0_57] : memref<16x2x128xf32, #tpu.memory_space<vmem>>, vector<1x2x128xf32>
    %249 = vector.shape_cast %248 : vector<1x2x128xf32> to vector<2x128xf32>
    %250 = arith.mulf %238, %1 : vector<2x128xf32>
    %251 = arith.addf %249, %250 : vector<2x128xf32>
    %252 = arith.mulf %220, %3 : vector<2x128xf32>
    %253 = arith.addf %251, %252 : vector<2x128xf32>
    %254 = arith.mulf %241, %5 : vector<2x128xf32>
    %255 = arith.addf %253, %254 : vector<2x128xf32>
    %256 = arith.mulf %244, %7 : vector<2x128xf32>
    %257 = arith.addf %255, %256 : vector<2x128xf32>
    %258 = arith.mulf %235, %9 : vector<2x128xf32>
    %259 = arith.addf %257, %258 : vector<2x128xf32>
    %260 = arith.mulf %247, %11 : vector<2x128xf32>
    %261 = arith.addf %259, %260 : vector<2x128xf32>
    %262 = math.tanh %261 : vector<2x128xf32>
    %c11_58 = arith.constant 11 : index
    %c0_59 = arith.constant 0 : index
    %c0_60 = arith.constant 0 : index
    %263 = vector.load %arg1[%c11_58, %c0_59, %c0_60] : memref<16x2x128xf32, #tpu.memory_space<vmem>>, vector<1x2x128xf32>
    %264 = vector.shape_cast %263 : vector<1x2x128xf32> to vector<2x128xf32>
    %265 = arith.mulf %238, %13 : vector<2x128xf32>
    %266 = arith.addf %264, %265 : vector<2x128xf32>
    %267 = arith.mulf %220, %15 : vector<2x128xf32>
    %268 = arith.addf %266, %267 : vector<2x128xf32>
    %269 = arith.mulf %241, %17 : vector<2x128xf32>
    %270 = arith.addf %268, %269 : vector<2x128xf32>
    %271 = arith.mulf %244, %19 : vector<2x128xf32>
    %272 = arith.addf %270, %271 : vector<2x128xf32>
    %273 = arith.mulf %235, %21 : vector<2x128xf32>
    %274 = arith.addf %272, %273 : vector<2x128xf32>
    %275 = arith.mulf %247, %23 : vector<2x128xf32>
    %276 = arith.addf %274, %275 : vector<2x128xf32>
    %277 = math.tanh %276 : vector<2x128xf32>
    %278 = vector.extract_strided_slice %262 {offsets = [0, 127], sizes = [2, 1], strides = [1, 1]} : vector<2x128xf32> to vector<2x1xf32>
    %279 = vector.extract_strided_slice %262 {offsets = [0, 0], sizes = [2, 127], strides = [1, 1]} : vector<2x128xf32> to vector<2x127xf32>
    %280 = tpu.concatenate %278, %279 in 1 : vector<2x1xf32>, vector<2x127xf32> -> vector<2x128xf32>
    %281 = vector.extract_strided_slice %262 {offsets = [0, 1], sizes = [2, 127], strides = [1, 1]} : vector<2x128xf32> to vector<2x127xf32>
    %282 = vector.extract_strided_slice %262 {offsets = [0, 0], sizes = [2, 1], strides = [1, 1]} : vector<2x128xf32> to vector<2x1xf32>
    %283 = tpu.concatenate %281, %282 in 1 : vector<2x127xf32>, vector<2x1xf32> -> vector<2x128xf32>
    %284 = vector.extract_strided_slice %277 {offsets = [0, 127], sizes = [2, 1], strides = [1, 1]} : vector<2x128xf32> to vector<2x1xf32>
    %285 = vector.extract_strided_slice %277 {offsets = [0, 0], sizes = [2, 127], strides = [1, 1]} : vector<2x128xf32> to vector<2x127xf32>
    %286 = tpu.concatenate %284, %285 in 1 : vector<2x1xf32>, vector<2x127xf32> -> vector<2x128xf32>
    %287 = vector.extract_strided_slice %277 {offsets = [0, 1], sizes = [2, 127], strides = [1, 1]} : vector<2x128xf32> to vector<2x127xf32>
    %288 = vector.extract_strided_slice %277 {offsets = [0, 0], sizes = [2, 1], strides = [1, 1]} : vector<2x128xf32> to vector<2x1xf32>
    %289 = tpu.concatenate %287, %288 in 1 : vector<2x127xf32>, vector<2x1xf32> -> vector<2x128xf32>
    %c12 = arith.constant 12 : index
    %c0_61 = arith.constant 0 : index
    %c0_62 = arith.constant 0 : index
    %290 = vector.load %arg1[%c12, %c0_61, %c0_62] : memref<16x2x128xf32, #tpu.memory_space<vmem>>, vector<1x2x128xf32>
    %291 = vector.shape_cast %290 : vector<1x2x128xf32> to vector<2x128xf32>
    %292 = arith.mulf %280, %1 : vector<2x128xf32>
    %293 = arith.addf %291, %292 : vector<2x128xf32>
    %294 = arith.mulf %262, %3 : vector<2x128xf32>
    %295 = arith.addf %293, %294 : vector<2x128xf32>
    %296 = arith.mulf %283, %5 : vector<2x128xf32>
    %297 = arith.addf %295, %296 : vector<2x128xf32>
    %298 = arith.mulf %286, %7 : vector<2x128xf32>
    %299 = arith.addf %297, %298 : vector<2x128xf32>
    %300 = arith.mulf %277, %9 : vector<2x128xf32>
    %301 = arith.addf %299, %300 : vector<2x128xf32>
    %302 = arith.mulf %289, %11 : vector<2x128xf32>
    %303 = arith.addf %301, %302 : vector<2x128xf32>
    %304 = math.tanh %303 : vector<2x128xf32>
    %c13 = arith.constant 13 : index
    %c0_63 = arith.constant 0 : index
    %c0_64 = arith.constant 0 : index
    %305 = vector.load %arg1[%c13, %c0_63, %c0_64] : memref<16x2x128xf32, #tpu.memory_space<vmem>>, vector<1x2x128xf32>
    %306 = vector.shape_cast %305 : vector<1x2x128xf32> to vector<2x128xf32>
    %307 = arith.mulf %280, %13 : vector<2x128xf32>
    %308 = arith.addf %306, %307 : vector<2x128xf32>
    %309 = arith.mulf %262, %15 : vector<2x128xf32>
    %310 = arith.addf %308, %309 : vector<2x128xf32>
    %311 = arith.mulf %283, %17 : vector<2x128xf32>
    %312 = arith.addf %310, %311 : vector<2x128xf32>
    %313 = arith.mulf %286, %19 : vector<2x128xf32>
    %314 = arith.addf %312, %313 : vector<2x128xf32>
    %315 = arith.mulf %277, %21 : vector<2x128xf32>
    %316 = arith.addf %314, %315 : vector<2x128xf32>
    %317 = arith.mulf %289, %23 : vector<2x128xf32>
    %318 = arith.addf %316, %317 : vector<2x128xf32>
    %319 = math.tanh %318 : vector<2x128xf32>
    %320 = vector.extract_strided_slice %304 {offsets = [0, 127], sizes = [2, 1], strides = [1, 1]} : vector<2x128xf32> to vector<2x1xf32>
    %321 = vector.extract_strided_slice %304 {offsets = [0, 0], sizes = [2, 127], strides = [1, 1]} : vector<2x128xf32> to vector<2x127xf32>
    %322 = tpu.concatenate %320, %321 in 1 : vector<2x1xf32>, vector<2x127xf32> -> vector<2x128xf32>
    %323 = vector.extract_strided_slice %304 {offsets = [0, 1], sizes = [2, 127], strides = [1, 1]} : vector<2x128xf32> to vector<2x127xf32>
    %324 = vector.extract_strided_slice %304 {offsets = [0, 0], sizes = [2, 1], strides = [1, 1]} : vector<2x128xf32> to vector<2x1xf32>
    %325 = tpu.concatenate %323, %324 in 1 : vector<2x127xf32>, vector<2x1xf32> -> vector<2x128xf32>
    %326 = vector.extract_strided_slice %319 {offsets = [0, 127], sizes = [2, 1], strides = [1, 1]} : vector<2x128xf32> to vector<2x1xf32>
    %327 = vector.extract_strided_slice %319 {offsets = [0, 0], sizes = [2, 127], strides = [1, 1]} : vector<2x128xf32> to vector<2x127xf32>
    %328 = tpu.concatenate %326, %327 in 1 : vector<2x1xf32>, vector<2x127xf32> -> vector<2x128xf32>
    %329 = vector.extract_strided_slice %319 {offsets = [0, 1], sizes = [2, 127], strides = [1, 1]} : vector<2x128xf32> to vector<2x127xf32>
    %330 = vector.extract_strided_slice %319 {offsets = [0, 0], sizes = [2, 1], strides = [1, 1]} : vector<2x128xf32> to vector<2x1xf32>
    %331 = tpu.concatenate %329, %330 in 1 : vector<2x127xf32>, vector<2x1xf32> -> vector<2x128xf32>
    %c14 = arith.constant 14 : index
    %c0_65 = arith.constant 0 : index
    %c0_66 = arith.constant 0 : index
    %332 = vector.load %arg1[%c14, %c0_65, %c0_66] : memref<16x2x128xf32, #tpu.memory_space<vmem>>, vector<1x2x128xf32>
    %333 = vector.shape_cast %332 : vector<1x2x128xf32> to vector<2x128xf32>
    %334 = arith.mulf %322, %1 : vector<2x128xf32>
    %335 = arith.addf %333, %334 : vector<2x128xf32>
    %336 = arith.mulf %304, %3 : vector<2x128xf32>
    %337 = arith.addf %335, %336 : vector<2x128xf32>
    %338 = arith.mulf %325, %5 : vector<2x128xf32>
    %339 = arith.addf %337, %338 : vector<2x128xf32>
    %340 = arith.mulf %328, %7 : vector<2x128xf32>
    %341 = arith.addf %339, %340 : vector<2x128xf32>
    %342 = arith.mulf %319, %9 : vector<2x128xf32>
    %343 = arith.addf %341, %342 : vector<2x128xf32>
    %344 = arith.mulf %331, %11 : vector<2x128xf32>
    %345 = arith.addf %343, %344 : vector<2x128xf32>
    %346 = math.tanh %345 : vector<2x128xf32>
    %c15 = arith.constant 15 : index
    %c0_67 = arith.constant 0 : index
    %c0_68 = arith.constant 0 : index
    %347 = vector.load %arg1[%c15, %c0_67, %c0_68] : memref<16x2x128xf32, #tpu.memory_space<vmem>>, vector<1x2x128xf32>
    %348 = vector.shape_cast %347 : vector<1x2x128xf32> to vector<2x128xf32>
    %349 = arith.mulf %322, %13 : vector<2x128xf32>
    %350 = arith.addf %348, %349 : vector<2x128xf32>
    %351 = arith.mulf %304, %15 : vector<2x128xf32>
    %352 = arith.addf %350, %351 : vector<2x128xf32>
    %353 = arith.mulf %325, %17 : vector<2x128xf32>
    %354 = arith.addf %352, %353 : vector<2x128xf32>
    %355 = arith.mulf %328, %19 : vector<2x128xf32>
    %356 = arith.addf %354, %355 : vector<2x128xf32>
    %357 = arith.mulf %319, %21 : vector<2x128xf32>
    %358 = arith.addf %356, %357 : vector<2x128xf32>
    %359 = arith.mulf %331, %23 : vector<2x128xf32>
    %360 = arith.addf %358, %359 : vector<2x128xf32>
    %361 = math.tanh %360 : vector<2x128xf32>
    %c0_69 = arith.constant 0 : index
    %c0_70 = arith.constant 0 : index
    %c0_71 = arith.constant 0 : index
    %362 = vector.load %arg3[%c0_69, %c0_70, %c0_71] : memref<2x128x128xf32, #tpu.memory_space<vmem>>, vector<1x128x128xf32>
    %363 = vector.shape_cast %362 : vector<1x128x128xf32> to vector<128x128xf32>
    %cst_72 = arith.constant dense<0.000000e+00> : vector<2x128xf32>
    %364 = tpu.matmul %346, %363, %cst_72 {dimension_numbers = #tpu.dot_dimension_numbers<[1], [0], [0], [1], [0, 0, 1, 1], [], []>} : vector<2x128xf32>, vector<128x128xf32>, vector<2x128xf32> -> vector<2x128xf32>
    %c1_73 = arith.constant 1 : index
    %c0_74 = arith.constant 0 : index
    %c0_75 = arith.constant 0 : index
    %365 = vector.load %arg3[%c1_73, %c0_74, %c0_75] : memref<2x128x128xf32, #tpu.memory_space<vmem>>, vector<1x128x128xf32>
    %366 = vector.shape_cast %365 : vector<1x128x128xf32> to vector<128x128xf32>
    %cst_76 = arith.constant dense<0.000000e+00> : vector<2x128xf32>
    %367 = tpu.matmul %361, %366, %cst_76 {dimension_numbers = #tpu.dot_dimension_numbers<[1], [0], [0], [1], [0, 0, 1, 1], [], []>} : vector<2x128xf32>, vector<128x128xf32>, vector<2x128xf32> -> vector<2x128xf32>
    %368 = arith.addf %364, %367 : vector<2x128xf32>
    %c0_77 = arith.constant 0 : index
    %c0_78 = arith.constant 0 : index
    %369 = vector.load %arg4[%c0_77, %c0_78] : memref<1x128xf32, #tpu.memory_space<vmem>>, vector<1x128xf32>
    %370 = vector.broadcast %369 : vector<1x128xf32> to vector<2x128xf32>
    %371 = arith.addf %368, %370 : vector<2x128xf32>
    %c0_79 = arith.constant 0 : index
    %c0_80 = arith.constant 0 : index
    %372 = vector.load %arg5[%c0_79, %c0_80] : memref<2x128xf32, #tpu.memory_space<vmem>>, vector<2x128xf32>
    tpu.vector_store %arg5[%c0_79, %c0_80], %371 {strides = array<i32>} : memref<2x128xf32, #tpu.memory_space<vmem>>, vector<2x128xf32>,
    return
  }
  func.func @transform_0(%arg0: i32) -> (i32, i32, i32) {
    %c0_i32 = arith.constant 0 : i32
    %c0_i32_0 = arith.constant 0 : i32
    %c0_i32_1 = arith.constant 0 : i32
    %c0_i32_2 = arith.constant 0 : i32
    return %c0_i32, %c0_i32_0, %c0_i32_1 : i32, i32, i32
  }
  func.func @transform_1(%arg0: i32) -> (i32, i32, i32) {
    %c0_i32 = arith.constant 0 : i32
    %c0_i32_0 = arith.constant 0 : i32
    %c0_i32_1 = arith.constant 0 : i32
    %c0_i32_2 = arith.constant 0 : i32
    return %c0_i32, %c0_i32_0, %c0_i32_1 : i32, i32, i32
  }
  func.func @transform_2(%arg0: i32) -> (i32, i32, i32) {
    %c0_i32 = arith.constant 0 : i32
    %c0_i32_0 = arith.constant 0 : i32
    %c0_i32_1 = arith.constant 0 : i32
    %c0_i32_2 = arith.constant 0 : i32
    return %c0_i32, %c0_i32_0, %c0_i32_1 : i32, i32, i32
  }
  func.func @transform_3(%arg0: i32) -> (i32, i32) {
    %c0_i32 = arith.constant 0 : i32
    %c0_i32_0 = arith.constant 0 : i32
    %c0_i32_1 = arith.constant 0 : i32
    return %c0_i32, %c0_i32_0 : i32, i32
  }
  func.func @transform_4(%arg0: i32) -> (i32, i32) {
    %c0_i32 = arith.constant 0 : i32
    %c0_i32_0 = arith.constant 0 : i32
    %c0_i32_1 = arith.constant 0 : i32
    return %c0_i32, %c0_i32_0 : i32, i32
  }
}

</mosaic_0001>

<llo_original>
// kernel: cornn_forward.1
$region0: #{cornn_forward.1}
  #allocation0 [shape = 'u32[]', space=smem, size = 0x4, offset = 0x4, fixed_abs, tag = 'smem constant byte address 0x4 - core index']
  #allocation1 [shape = 'u32[72,128]{1,0:T(1,128)}', space=vmem, size = 0x9000, scoped, tag = 'internal scratch']
  %s0 = inlined_call_operand.vmem [shape: f32[16,2,128], index: 0, kind: input, shape index: {}]
  %s1 = inlined_call_operand.vmem [shape: f32[12,2,128], index: 1, kind: input, shape index: {}]
  %s2 = inlined_call_operand.vmem [shape: f32[2,128,128], index: 2, kind: input, shape index: {}]
  %s3 = inlined_call_operand.vmem [shape: f32[1,128], index: 3, kind: input, shape index: {}]
  %s4 = inlined_call_operand.hbm [shape: f32[2,128], index: 4, kind: output, shape index: {}]
  %s5 = sld [smem:[#allocation0]]
  $region26: #{cornn_forward.1} parent=0
    _
  %s7 = ssub.s32 1, %s5
  %s8 = scalar_select 0, %s7, %s5
  $region1: #{cornn_forward.1} parent=0
    #allocation2 [shape = 'u8[1024]{0}', space=vmem, size = 0x400, scoped, tag = 'output window, operand 0, single buffered']
    #allocation3 [shape = 's32[1]{0}', space=sflag, size = 0x4, scoped, tag = 'scoped memory for cornn_forward.1']
    %9 = vsyncpa [#allocation3], 0
    // Predicated region
    $region2: #{cornn_forward.1} parent=1 // pred_check
      _
    $region3: #{cornn_forward.1} parent=1 // pred_check_branch
      %11 = sbr.rel (0) target = $region5
    $region4: #{cornn_forward.1} parent=1 // pred_region
      _
    $region5: #{cornn_forward.1} parent=1 // pred_fallthru
      _
    // Predicated region
    $region6: #{cornn_forward.1} parent=1 // pred_check
      _
    $region7: #{cornn_forward.1} parent=1 // pred_check_branch
      %13 = sbr.rel (0) target = $region9
    $region8: #{cornn_forward.1} parent=1 // pred_region
      _
    $region9: #{cornn_forward.1} parent=1 // pred_fallthru
      _
    // Predicated region
    $region10: #{cornn_forward.1} parent=1 // pred_check
      _
    $region11: #{cornn_forward.1} parent=1 // pred_check_branch
      %15 = sbr.rel (0) target = $region13
    $region12: #{cornn_forward.1} parent=1 // pred_region
      _
    $region13: #{cornn_forward.1} parent=1 // pred_fallthru
      _
    // Predicated region
    $region14: #{cornn_forward.1} parent=1 // pred_check
      _
    $region15: #{cornn_forward.1} parent=1 // pred_check_branch
      %17 = sbr.rel (0) target = $region17
    $region16: #{cornn_forward.1} parent=1 // pred_region
      _
    $region17: #{cornn_forward.1} parent=1 // pred_fallthru
      _
    %v18 = vld [vmem:[%s1] sm:$0x3]
    %s19 = scalar_lea.vmem %s1, 2
    %v20 = vld [vmem:[%s19] sm:$0x3]
    %s21 = scalar_lea.vmem %s1, 4
    %v22 = vld [vmem:[%s21] sm:$0x3]
    %s23 = scalar_lea.vmem %s1, 6
    %v24 = vld [vmem:[%s23] sm:$0x3]
    %s25 = scalar_lea.vmem %s1, 8
    %v26 = vld [vmem:[%s25] sm:$0x3]
    %s27 = scalar_lea.vmem %s1, 10
    %v28 = vld [vmem:[%s27] sm:$0x3]
    %s29 = scalar_lea.vmem %s1, 12
    %v30 = vld [vmem:[%s29] sm:$0x3]
    %s31 = scalar_lea.vmem %s1, 14
    %v32 = vld [vmem:[%s31] sm:$0x3]
    %s33 = scalar_lea.vmem %s1, 16
    %v34 = vld [vmem:[%s33] sm:$0x3]
    %s35 = scalar_lea.vmem %s1, 18
    %v36 = vld [vmem:[%s35] sm:$0x3]
    %s37 = scalar_lea.vmem %s1, 20
    %v38 = vld [vmem:[%s37] sm:$0x3]
    %s39 = scalar_lea.vmem %s1, 22
    %v40 = vld [vmem:[%s39] sm:$0x3]
    %v41 = vld [vmem:[%s0] sm:$0x3]
    %v42 = vmul.f32 %v18, 0.0
    %v43 = vadd.f32 %v41, %v42
    %v44 = vmul.f32 %v20, 0.0
    %v45 = vadd.f32 %v43, %v44
    %v46 = vmul.f32 %v22, 0.0
    %v47 = vadd.f32 %v45, %v46
    %v48 = vmul.f32 %v24, 0.0
    %v49 = vadd.f32 %v47, %v48
    %v50 = vmul.f32 %v26, 0.0
    %v51 = vadd.f32 %v49, %v50
    %v52 = vmul.f32 %v28, 0.0
    %v53 = vadd.f32 %v51, %v52
    %v54 = vtanh.pop %v53
    %s55 = scalar_lea.vmem %s0, 2
    %v56 = vld [vmem:[%s55] sm:$0x3]
    %v57 = vmul.f32 %v30, 0.0
    %v58 = vadd.f32 %v56, %v57
    %v59 = vmul.f32 %v32, 0.0
    %v60 = vadd.f32 %v58, %v59
    %v61 = vmul.f32 %v34, 0.0
    %v62 = vadd.f32 %v60, %v61
    %v63 = vmul.f32 %v36, 0.0
    %v64 = vadd.f32 %v62, %v63
    %v65 = vmul.f32 %v38, 0.0
    %v66 = vadd.f32 %v64, %v65
    %v67 = vmul.f32 %v40, 0.0
    %v68 = vadd.f32 %v66, %v67
    %v69 = vtanh.pop %v68
    %71 = vrot.lane.b32.xlu0 %v54, 1
    %v72 = vpop.permute.xlu0 %71
    %74 = vrot.lane.b32.xlu0 %v54, 127
    %v75 = vpop.permute.xlu0 %74
    %78 = vrot.lane.b32.xlu0 %v69, 1
    %v79 = vpop.permute.xlu0 %78
    %81 = vrot.lane.b32.xlu0 %v69, 127
    %v82 = vpop.permute.xlu0 %81
    %s84 = scalar_lea.vmem %s0, 4
    %v85 = vld [vmem:[%s84] sm:$0x3]
    %v86 = vmul.f32 %v72, %v18
    %v87 = vadd.f32 %v85, %v86
    %v88 = vmul.f32 %v54, %v20
    %v89 = vadd.f32 %v87, %v88
    %v90 = vmul.f32 %v75, %v22
    %v91 = vadd.f32 %v89, %v90
    %v92 = vmul.f32 %v79, %v24
    %v93 = vadd.f32 %v91, %v92
    %v94 = vmul.f32 %v69, %v26
    %v95 = vadd.f32 %v93, %v94
    %v96 = vmul.f32 %v82, %v28
    %v97 = vadd.f32 %v95, %v96
    %v98 = vtanh.pop %v97
    %s99 = scalar_lea.vmem %s0, 6
    %v100 = vld [vmem:[%s99] sm:$0x3]
    %v101 = vmul.f32 %v72, %v30
    %v102 = vadd.f32 %v100, %v101
    %v103 = vmul.f32 %v54, %v32
    %v104 = vadd.f32 %v102, %v103
    %v105 = vmul.f32 %v75, %v34
    %v106 = vadd.f32 %v104, %v105
    %v107 = vmul.f32 %v79, %v36
    %v108 = vadd.f32 %v106, %v107
    %v109 = vmul.f32 %v69, %v38
    %v110 = vadd.f32 %v108, %v109
    %v111 = vmul.f32 %v82, %v40
    %v112 = vadd.f32 %v110, %v111
    %v113 = vtanh.pop %v112
    %115 = vrot.lane.b32.xlu0 %v98, 1
    %v116 = vpop.permute.xlu0 %115
    %118 = vrot.lane.b32.xlu0 %v98, 127
    %v119 = vpop.permute.xlu0 %118
    %122 = vrot.lane.b32.xlu0 %v113, 1
    %v123 = vpop.permute.xlu0 %122
    %125 = vrot.lane.b32.xlu0 %v113, 127
    %v126 = vpop.permute.xlu0 %125
    %s128 = scalar_lea.vmem %s0, 8
    %v129 = vld [vmem:[%s128] sm:$0x3]
    %v130 = vmul.f32 %v116, %v18
    %v131 = vadd.f32 %v129, %v130
    %v132 = vmul.f32 %v98, %v20
    %v133 = vadd.f32 %v131, %v132
    %v134 = vmul.f32 %v119, %v22
    %v135 = vadd.f32 %v133, %v134
    %v136 = vmul.f32 %v123, %v24
    %v137 = vadd.f32 %v135, %v136
    %v138 = vmul.f32 %v113, %v26
    %v139 = vadd.f32 %v137, %v138
    %v140 = vmul.f32 %v126, %v28
    %v141 = vadd.f32 %v139, %v140
    %v142 = vtanh.pop %v141
    %s143 = scalar_lea.vmem %s0, 10
    %v144 = vld [vmem:[%s143] sm:$0x3]
    %v145 = vmul.f32 %v116, %v30
    %v146 = vadd.f32 %v144, %v145
    %v147 = vmul.f32 %v98, %v32
    %v148 = vadd.f32 %v146, %v147
    %v149 = vmul.f32 %v119, %v34
    %v150 = vadd.f32 %v148, %v149
    %v151 = vmul.f32 %v123, %v36
    %v152 = vadd.f32 %v150, %v151
    %v153 = vmul.f32 %v113, %v38
    %v154 = vadd.f32 %v152, %v153
    %v155 = vmul.f32 %v126, %v40
    %v156 = vadd.f32 %v154, %v155
    %v157 = vtanh.pop %v156
    %159 = vrot.lane.b32.xlu0 %v142, 1
    %v160 = vpop.permute.xlu0 %159
    %162 = vrot.lane.b32.xlu0 %v142, 127
    %v163 = vpop.permute.xlu0 %162
    %166 = vrot.lane.b32.xlu0 %v157, 1
    %v167 = vpop.permute.xlu0 %166
    %169 = vrot.lane.b32.xlu0 %v157, 127
    %v170 = vpop.permute.xlu0 %169
    %s172 = scalar_lea.vmem %s0, 12
    %v173 = vld [vmem:[%s172] sm:$0x3]
    %v174 = vmul.f32 %v160, %v18
    %v175 = vadd.f32 %v173, %v174
    %v176 = vmul.f32 %v142, %v20
    %v177 = vadd.f32 %v175, %v176
    %v178 = vmul.f32 %v163, %v22
    %v179 = vadd.f32 %v177, %v178
    %v180 = vmul.f32 %v167, %v24
    %v181 = vadd.f32 %v179, %v180
    %v182 = vmul.f32 %v157, %v26
    %v183 = vadd.f32 %v181, %v182
    %v184 = vmul.f32 %v170, %v28
    %v185 = vadd.f32 %v183, %v184
    %v186 = vtanh.pop %v185
    %s187 = scalar_lea.vmem %s0, 14
    %v188 = vld [vmem:[%s187] sm:$0x3]
    %v189 = vmul.f32 %v160, %v30
    %v190 = vadd.f32 %v188, %v189
    %v191 = vmul.f32 %v142, %v32
    %v192 = vadd.f32 %v190, %v191
    %v193 = vmul.f32 %v163, %v34
    %v194 = vadd.f32 %v192, %v193
    %v195 = vmul.f32 %v167, %v36
    %v196 = vadd.f32 %v194, %v195
    %v197 = vmul.f32 %v157, %v38
    %v198 = vadd.f32 %v196, %v197
    %v199 = vmul.f32 %v170, %v40
    %v200 = vadd.f32 %v198, %v199
    %v201 = vtanh.pop %v200
    %203 = vrot.lane.b32.xlu0 %v186, 1
    %v204 = vpop.permute.xlu0 %203
    %206 = vrot.lane.b32.xlu0 %v186, 127
    %v207 = vpop.permute.xlu0 %206
    %210 = vrot.lane.b32.xlu0 %v201, 1
    %v211 = vpop.permute.xlu0 %210
    %213 = vrot.lane.b32.xlu0 %v201, 127
    %v214 = vpop.permute.xlu0 %213
    %s216 = scalar_lea.vmem %s0, 16
    %v217 = vld [vmem:[%s216] sm:$0x3]
    %v218 = vmul.f32 %v204, %v18
    %v219 = vadd.f32 %v217, %v218
    %v220 = vmul.f32 %v186, %v20
    %v221 = vadd.f32 %v219, %v220
    %v222 = vmul.f32 %v207, %v22
    %v223 = vadd.f32 %v221, %v222
    %v224 = vmul.f32 %v211, %v24
    %v225 = vadd.f32 %v223, %v224
    %v226 = vmul.f32 %v201, %v26
    %v227 = vadd.f32 %v225, %v226
    %v228 = vmul.f32 %v214, %v28
    %v229 = vadd.f32 %v227, %v228
    %v230 = vtanh.pop %v229
    %s231 = scalar_lea.vmem %s0, 18
    %v232 = vld [vmem:[%s231] sm:$0x3]
    %v233 = vmul.f32 %v204, %v30
    %v234 = vadd.f32 %v232, %v233
    %v235 = vmul.f32 %v186, %v32
    %v236 = vadd.f32 %v234, %v235
    %v237 = vmul.f32 %v207, %v34
    %v238 = vadd.f32 %v236, %v237
    %v239 = vmul.f32 %v211, %v36
    %v240 = vadd.f32 %v238, %v239
    %v241 = vmul.f32 %v201, %v38
    %v242 = vadd.f32 %v240, %v241
    %v243 = vmul.f32 %v214, %v40
    %v244 = vadd.f32 %v242, %v243
    %v245 = vtanh.pop %v244
    %247 = vrot.lane.b32.xlu0 %v230, 1
    %v248 = vpop.permute.xlu0 %247
    %250 = vrot.lane.b32.xlu0 %v230, 127
    %v251 = vpop.permute.xlu0 %250
    %254 = vrot.lane.b32.xlu0 %v245, 1
    %v255 = vpop.permute.xlu0 %254
    %257 = vrot.lane.b32.xlu0 %v245, 127
    %v258 = vpop.permute.xlu0 %257
    %s260 = scalar_lea.vmem %s0, 20
    %v261 = vld [vmem:[%s260] sm:$0x3]
    %v262 = vmul.f32 %v248, %v18
    %v263 = vadd.f32 %v261, %v262
    %v264 = vmul.f32 %v230, %v20
    %v265 = vadd.f32 %v263, %v264
    %v266 = vmul.f32 %v251, %v22
    %v267 = vadd.f32 %v265, %v266
    %v268 = vmul.f32 %v255, %v24
    %v269 = vadd.f32 %v267, %v268
    %v270 = vmul.f32 %v245, %v26
    %v271 = vadd.f32 %v269, %v270
    %v272 = vmul.f32 %v258, %v28
    %v273 = vadd.f32 %v271, %v272
    %v274 = vtanh.pop %v273
    %s275 = scalar_lea.vmem %s0, 22
    %v276 = vld [vmem:[%s275] sm:$0x3]
    %v277 = vmul.f32 %v248, %v30
    %v278 = vadd.f32 %v276, %v277
    %v279 = vmul.f32 %v230, %v32
    %v280 = vadd.f32 %v278, %v279
    %v281 = vmul.f32 %v251, %v34
    %v282 = vadd.f32 %v280, %v281
    %v283 = vmul.f32 %v255, %v36
    %v284 = vadd.f32 %v282, %v283
    %v285 = vmul.f32 %v245, %v38
    %v286 = vadd.f32 %v284, %v285
    %v287 = vmul.f32 %v258, %v40
    %v288 = vadd.f32 %v286, %v287
    %v289 = vtanh.pop %v288
    %291 = vrot.lane.b32.xlu0 %v274, 1
    %v292 = vpop.permute.xlu0 %291
    %294 = vrot.lane.b32.xlu0 %v274, 127
    %v295 = vpop.permute.xlu0 %294
    %298 = vrot.lane.b32.xlu0 %v289, 1
    %v299 = vpop.permute.xlu0 %298
    %301 = vrot.lane.b32.xlu0 %v289, 127
    %v302 = vpop.permute.xlu0 %301
    %s304 = scalar_lea.vmem %s0, 24
    %v305 = vld [vmem:[%s304] sm:$0x3]
    %v306 = vmul.f32 %v292, %v18
    %v307 = vadd.f32 %v305, %v306
    %v308 = vmul.f32 %v274, %v20
    %v309 = vadd.f32 %v307, %v308
    %v310 = vmul.f32 %v295, %v22
    %v311 = vadd.f32 %v309, %v310
    %v312 = vmul.f32 %v299, %v24
    %v313 = vadd.f32 %v311, %v312
    %v314 = vmul.f32 %v289, %v26
    %v315 = vadd.f32 %v313, %v314
    %v316 = vmul.f32 %v302, %v28
    %v317 = vadd.f32 %v315, %v316
    %v318 = vtanh.pop %v317
    %s319 = scalar_lea.vmem %s0, 26
    %v320 = vld [vmem:[%s319] sm:$0x3]
    %v321 = vmul.f32 %v292, %v30
    %v322 = vadd.f32 %v320, %v321
    %v323 = vmul.f32 %v274, %v32
    %v324 = vadd.f32 %v322, %v323
    %v325 = vmul.f32 %v295, %v34
    %v326 = vadd.f32 %v324, %v325
    %v327 = vmul.f32 %v299, %v36
    %v328 = vadd.f32 %v326, %v327
    %v329 = vmul.f32 %v289, %v38
    %v330 = vadd.f32 %v328, %v329
    %v331 = vmul.f32 %v302, %v40
    %v332 = vadd.f32 %v330, %v331
    %v333 = vtanh.pop %v332
    %335 = vrot.lane.b32.xlu0 %v318, 1
    %v336 = vpop.permute.xlu0 %335
    %338 = vrot.lane.b32.xlu0 %v318, 127
    %v339 = vpop.permute.xlu0 %338
    %342 = vrot.lane.b32.xlu0 %v333, 1
    %v343 = vpop.permute.xlu0 %342
    %345 = vrot.lane.b32.xlu0 %v333, 127
    %v346 = vpop.permute.xlu0 %345
    %s348 = scalar_lea.vmem %s0, 28
    %v349 = vld [vmem:[%s348] sm:$0x3]
    %v350 = vmul.f32 %v336, %v18
    %v351 = vadd.f32 %v349, %v350
    %v352 = vmul.f32 %v318, %v20
    %v353 = vadd.f32 %v351, %v352
    %v354 = vmul.f32 %v339, %v22
    %v355 = vadd.f32 %v353, %v354
    %v356 = vmul.f32 %v343, %v24
    %v357 = vadd.f32 %v355, %v356
    %v358 = vmul.f32 %v333, %v26
    %v359 = vadd.f32 %v357, %v358
    %v360 = vmul.f32 %v346, %v28
    %v361 = vadd.f32 %v359, %v360
    %v362 = vtanh.pop %v361
    %s363 = scalar_lea.vmem %s0, 30
    %v364 = vld [vmem:[%s363] sm:$0x3]
    %v365 = vmul.f32 %v336, %v30
    %v366 = vadd.f32 %v364, %v365
    %v367 = vmul.f32 %v318, %v32
    %v368 = vadd.f32 %v366, %v367
    %v369 = vmul.f32 %v339, %v34
    %v370 = vadd.f32 %v368, %v369
    %v371 = vmul.f32 %v343, %v36
    %v372 = vadd.f32 %v370, %v371
    %v373 = vmul.f32 %v333, %v38
    %v374 = vadd.f32 %v372, %v373
    %v375 = vmul.f32 %v346, %v40
    %v376 = vadd.f32 %v374, %v375
    %v377 = vtanh.pop %v376
    %v378 = vld [vmem:[%s2] sm:$0xff]
    %v379 = vld [vmem:[%s2 + $0x8] sm:$0xff]
    %v380 = vld [vmem:[%s2 + $0x10] sm:$0xff]
    %v381 = vld [vmem:[%s2 + $0x18] sm:$0xff]
    %v382 = vld [vmem:[%s2 + $0x20] sm:$0xff]
    %v383 = vld [vmem:[%s2 + $0x28] sm:$0xff]
    %v384 = vld [vmem:[%s2 + $0x30] sm:$0xff]
    %v385 = vld [vmem:[%s2 + $0x38] sm:$0xff]
    %v386 = vld [vmem:[%s2 + $0x40] sm:$0xff]
    %v387 = vld [vmem:[%s2 + $0x48] sm:$0xff]
    %v388 = vld [vmem:[%s2 + $0x50] sm:$0xff]
    %v389 = vld [vmem:[%s2 + $0x58] sm:$0xff]
    %v390 = vld [vmem:[%s2 + $0x60] sm:$0xff]
    %v391 = vld [vmem:[%s2 + $0x68] sm:$0xff]
    %v392 = vld [vmem:[%s2 + $0x70] sm:$0xff]
    %v393 = vld [vmem:[%s2 + $0x78] sm:$0xff]
    %s394 = scalar_lea.vmem %s2, 128
    %v395 = vld [vmem:[%s394] sm:$0xff]
    %v396 = vld [vmem:[%s394 + $0x8] sm:$0xff]
    %v397 = vld [vmem:[%s394 + $0x10] sm:$0xff]
    %v398 = vld [vmem:[%s394 + $0x18] sm:$0xff]
    %v399 = vld [vmem:[%s394 + $0x20] sm:$0xff]
    %v400 = vld [vmem:[%s394 + $0x28] sm:$0xff]
    %v401 = vld [vmem:[%s394 + $0x30] sm:$0xff]
    %v402 = vld [vmem:[%s394 + $0x38] sm:$0xff]
    %v403 = vld [vmem:[%s394 + $0x40] sm:$0xff]
    %v404 = vld [vmem:[%s394 + $0x48] sm:$0xff]
    %v405 = vld [vmem:[%s394 + $0x50] sm:$0xff]
    %v406 = vld [vmem:[%s394 + $0x58] sm:$0xff]
    %v407 = vld [vmem:[%s394 + $0x60] sm:$0xff]
    %v408 = vld [vmem:[%s394 + $0x68] sm:$0xff]
    %v409 = vld [vmem:[%s394 + $0x70] sm:$0xff]
    %v410 = vld [vmem:[%s394 + $0x78] sm:$0xff]
    %411 = vmatpush.msra.mxu0 %v410
    %412 = vmatpush.msra.mxu0 %v409
    %413 = vmatpush.msra.mxu0 %v408
    %414 = vmatpush.msra.mxu0 %v407
    %415 = vmatpush.msra.mxu0 %v406
    %416 = vmatpush.msra.mxu0 %v405
    %417 = vmatpush.msra.mxu0 %v404
    %418 = vmatpush.msra.mxu0 %v403
    %419 = vmatpush.msra.mxu0 %v402
    %420 = vmatpush.msra.mxu0 %v401
    %421 = vmatpush.msra.mxu0 %v400
    %422 = vmatpush.msra.mxu0 %v399
    %423 = vmatpush.msra.mxu0 %v398
    %424 = vmatpush.msra.mxu0 %v397
    %425 = vmatpush.msra.mxu0 %v396
    %426 = vmatpush.msra.mxu0 %v395
    %427 = vmatmul.f32.gmra.mxu0 %v377
    %v428 = vpop.f32.mrf.mxu0
    %v429 = vadd.f32 0.0, %v428
    %430 = vdwg.mxu0
    %431 = vmatpush.msra.mxu0 %v393
    %432 = vmatpush.msra.mxu0 %v392
    %433 = vmatpush.msra.mxu0 %v391
    %434 = vmatpush.msra.mxu0 %v390
    %435 = vmatpush.msra.mxu0 %v389
    %436 = vmatpush.msra.mxu0 %v388
    %437 = vmatpush.msra.mxu0 %v387
    %438 = vmatpush.msra.mxu0 %v386
    %439 = vmatpush.msra.mxu0 %v385
    %440 = vmatpush.msra.mxu0 %v384
    %441 = vmatpush.msra.mxu0 %v383
    %442 = vmatpush.msra.mxu0 %v382
    %443 = vmatpush.msra.mxu0 %v381
    %444 = vmatpush.msra.mxu0 %v380
    %445 = vmatpush.msra.mxu0 %v379
    %446 = vmatpush.msra.mxu0 %v378
    %447 = vmatmul.f32.gmra.mxu0 %v362
    %v448 = vpop.f32.mrf.mxu0
    %v449 = vadd.f32 %v429, %v448
    %450 = vdwg.mxu0
    %v451 = vld [vmem:[%s3] sm:$0x1]
    %v453 = vperm.slane %v451, 0
    %v455 = vadd.f32 %v449, %v453
    %456 = vst [vmem:[#allocation2] sm:$0x3] %v455
    // Predicated region
    $region18: #{cornn_forward.1} parent=1 // pred_check
      _
    $region19: #{cornn_forward.1} parent=1 // pred_check_branch
      %458 = sbr.rel (0) target = $region21
    $region20: #{cornn_forward.1} parent=1 // pred_region
      %460 = vsyncadd [#allocation3], 0
      %s462 = sshll.u32 [#allocation2], 4
      %s463 = int_to_ptr.vmem [resolvable:$true] %s462
      %s464 = sshll.u32 %s4, 4
      %s465 = int_to_ptr.hbm [resolvable:$true] %s464
      %467 = dma.vmem_to_hbm [thread:$0]  %s463, 32, %s465, [#allocation3]
    $region21: #{cornn_forward.1} parent=1 // pred_fallthru
      _
    // Predicated region
    $region22: #{cornn_forward.1} parent=1 // pred_check
      _
    $region23: #{cornn_forward.1} parent=1 // pred_check_branch
      %469 = sbr.rel (0) target = $region25
    $region24: #{cornn_forward.1} parent=1 // pred_region
      %471 = dma.done [#allocation3], 32
    $region25: #{cornn_forward.1} parent=1 // pred_fallthru
      _
    %472 = vsyncpa [#allocation3], 1

</llo_original>
